<compile_context>
chip_gen: v6e
topology: v6e:2x2x1
jax: 0.10.0
libtpu: 0.0.40
codegen_flags: <defaults>
</compile_context>

<pallas_src>
import functools

import jax
import jax.numpy as jnp
from jax.experimental import pallas as pl
from jax.experimental.pallas import tpu as pltpu


def _round_up(n, m):
    return ((n + m - 1) // m) * m


def _fcnn_kernel(num_linear, x_ref, *refs):
    """FCNN forward for one batch tile, feature-major (batch on lanes).

    x_ref : [f0_pad, TB]            bf16 activation tile
    refs  : (w0, b0, w1, b1, ..., o_ref)
      w_i : [out_pad_i, in_pad_i]   bf16 (PyTorch [out, in] layout, zero padded)
      b_i : [out_pad_i, 1]          f32
      o   : [1, TB]                 f32 (only the real scalar-output row)
    """
    o_ref = refs[-1]
    h = x_ref[...]                                  # bf16 on entry
    for i in range(num_linear):
        w = refs[2 * i][...]                        # bf16
        b = refs[2 * i + 1][...]                    # f32
        # MXU: M = out_pad (small), N = TB (lane-wide batch), K = in_pad.
        acc = jnp.dot(w, h.astype(jnp.bfloat16),
                      preferred_element_type=jnp.float32)
        h = acc + b                                 # bias/ReLU math stays f32 (v5e-safe)
        if i < num_linear - 1:                      # ReLU between hidden layers only
            h = jnp.maximum(h, 0.0)
    # Store only the real output row (row 0); padded rows are never written.
    o_ref[...] = h[:1, :].astype(o_ref.dtype)


@functools.partial(jax.jit, static_argnames=("batch_tile",))
def fcnn_forward(x, weights, biases, *, batch_tile=8192):
    """FCNN forward pass with a Pallas kernel.

    x:       [batch, input_shape] float32
    weights: list of [out_i, in_i] float32   (PyTorch nn.Linear layout)
    biases:  list of [out_i]       float32
    returns: [batch, 1] float32
    """
    assert len(weights) == len(biases)
    num_linear = len(weights)
    batch, in_features = x.shape

    in_dims = [int(w.shape[1]) for w in weights]
    out_dims = [int(w.shape[0]) for w in weights]
    assert in_dims[0] == in_features
    assert out_dims[-1] == 1

    # Feature widths padded to multiples of 16 (bf16 sublane packing).
    f_pad = [_round_up(in_features, 16)] + [_round_up(d, 16) for d in out_dims]

    # Batch tiling along the lane axis (multiples of 128).
    b_pad128 = _round_up(batch, 128)
    tb = min(_round_up(batch_tile, 128), b_pad128)
    if b_pad128 > 128 and tb >= b_pad128:
        # v7x megacore: guarantee >= 2 grid steps whenever the batch spans more
        # than one 128-lane block, so both TensorCores get work.
        tb = _round_up(b_pad128 // 2, 128)
    b_pad = _round_up(batch, tb)
    num_tiles = b_pad // tb

    # --- Layout prep (inside this jit -> XLA fuses pad + transpose + casts) ----
    x_t = jnp.pad(x.astype(jnp.float32).T,
                  ((0, f_pad[0] - in_features), (0, b_pad - batch))
                  ).astype(jnp.bfloat16)

    w_pads, b_pads = [], []
    for i, (w, b) in enumerate(zip(weights, biases)):
        wp = jnp.pad(w.astype(jnp.float32),
                     ((0, f_pad[i + 1] - out_dims[i]), (0, f_pad[i] - in_dims[i]))
                     ).astype(jnp.bfloat16)
        bp = jnp.pad(b.astype(jnp.float32).reshape(-1, 1),
                     ((0, f_pad[i + 1] - out_dims[i]), (0, 0)))
        w_pads.append(wp)
        b_pads.append(bp)

    operands = [x_t]
    for wp, bp in zip(w_pads, b_pads):
        operands.append(wp)
        operands.append(bp)

    # --- BlockSpecs -------------------------------------------------------------
    in_specs = [pl.BlockSpec((f_pad[0], tb), lambda i: (0, i))]
    for wp, bp in zip(w_pads, b_pads):
        # Constant block index -> parameters stay resident in VMEM across the grid.
        in_specs.append(pl.BlockSpec(wp.shape, lambda i: (0, 0)))
        in_specs.append(pl.BlockSpec(bp.shape, lambda i: (0, 0)))
    # Only the real scalar output row is stored; lane-dense since tb % 128 == 0.
    out_spec = pl.BlockSpec((1, tb), lambda i: (0, i))

    # Advisory cost estimate for XLA's scheduler.
    flops = 2 * b_pad * sum(f_pad[i] * f_pad[i + 1] for i in range(num_linear))
    param_bytes = sum(int(wp.size) * 2 + int(bp.size) * 4
                      for wp, bp in zip(w_pads, b_pads))
    bytes_accessed = int(x_t.size) * 2 + b_pad * 4 + param_bytes
    cost = pl.CostEstimate(flops=int(flops), transcendentals=0,
                           bytes_accessed=int(bytes_accessed))

    # Conservative per-kernel VMEM footprint: double-buffered x/out tiles,
    # (possibly double-buffered) resident params, and live f32 intermediates.
    vmem_est = (2 * (f_pad[0] * tb * 2 + tb * 4)
                + 2 * param_bytes
                + 3 * max(f_pad) * tb * 4)
    # Raise the scoped-VMEM limit for big tiles (v5e default is only 16 MiB);
    # never exceed v7x's 64 MiB physical VMEM.
    vmem_limit = int(min(64 * 1024 * 1024, max(32 * 1024 * 1024, 2 * vmem_est)))

    out_padded = pl.pallas_call(
        functools.partial(_fcnn_kernel, num_linear),
        out_shape=jax.ShapeDtypeStruct((1, b_pad), jnp.float32),
        grid=(num_tiles,),
        in_specs=in_specs,
        out_specs=out_spec,
        compiler_params=pltpu.CompilerParams(
            dimension_semantics=("parallel",),
            vmem_limit_bytes=vmem_limit),
        cost_estimate=cost,
    )(*operands)

    # [1, b_pad] -> [batch, 1]
    return out_padded[:, :batch].T


def make_fcnn_params(key, input_shape, num_layers, neurons):
    """Deterministic synthetic parameters with PyTorch nn.Linear shapes/init."""
    dims = [input_shape] + list(neurons[:num_layers]) + [1]
    weights, biases = [], []
    for i in range(len(dims) - 1):
        key, kw, kb = jax.random.split(key, 3)
        fan_in = dims[i]
        bound = 1.0 / float(jnp.sqrt(fan_in))
        weights.append(
            jax.random.uniform(kw, (dims[i + 1], dims[i]), jnp.float32, -bound, bound))
        biases.append(
            jax.random.uniform(kb, (dims[i + 1],), jnp.float32, -bound, bound))
    return weights, biases


def fcnn_reference_f32(x, weights, biases):
    """Pure-JAX f32 reference (PyTorch semantics: y = x @ W.T + b, ReLU between)."""
    h = x
    for i, (w, b) in enumerate(zip(weights, biases)):
        h = h @ w.T + b
        if i < len(weights) - 1:
            h = jnp.maximum(h, 0.0)
    return h


def fcnn_reference_bf16(x, weights, biases):
    """Reference matching the kernel's mixed precision (bf16 dot, f32 bias/ReLU)."""
    h = x.astype(jnp.float32)
    for i, (w, b) in enumerate(zip(weights, biases)):
        h = jnp.dot(h.astype(jnp.bfloat16),
                    w.astype(jnp.bfloat16).T,
                    preferred_element_type=jnp.float32) + b
        if i < len(weights) - 1:
            h = jnp.maximum(h, 0.0)
    return h


if __name__ == "__main__":
    # Module config: FCNN(input_shape=4, num_layers=3, neurons=[32,32,32],
    #                     activator_id=5 -> ReLU)
    input_shape = 4
    num_layers = 3
    neurons = [32, 32, 32]
    batch = 8

    key = jax.random.PRNGKey(0)
    key, kx = jax.random.split(key)
    x = jax.random.normal(kx, (batch, input_shape), jnp.float32)

    weights, biases = make_fcnn_params(key, input_shape, num_layers, neurons)

    out = fcnn_forward(x, weights, biases)
    out = jax.block_until_ready(out)
    assert out.shape == (batch, 1), out.shape

    # Tight check against a reference that uses the same bf16-matmul precision.
    ref_bf16 = fcnn_reference_bf16(x, weights, biases)
    assert jnp.allclose(out, ref_bf16, atol=1e-4, rtol=1e-4), (out, ref_bf16)

    # Loose check against the full-f32 PyTorch-semantics reference
    # (bf16 matmul inputs -> ~1e-3..1e-2 deviation is expected).
    ref_f32 = fcnn_reference_f32(x, weights, biases)
    assert jnp.allclose(out, ref_f32, atol=5e-2, rtol=5e-2), (out, ref_f32)

    print("KERNEL_OK")
</pallas_src>

<mosaic_0001>
module attributes {stable_mosaic.version = 11 : i64} {
  func.func @_fcnn_kernel(%arg0: i32, %arg1: memref<16x128xbf16, #tpu.memory_space<vmem>>, %arg2: memref<32x16xbf16, #tpu.memory_space<vmem>>, %arg3: memref<32x1xf32, #tpu.memory_space<vmem>>, %arg4: memref<32x32xbf16, #tpu.memory_space<vmem>>, %arg5: memref<32x1xf32, #tpu.memory_space<vmem>>, %arg6: memref<32x32xbf16, #tpu.memory_space<vmem>>, %arg7: memref<32x1xf32, #tpu.memory_space<vmem>>, %arg8: memref<16x32xbf16, #tpu.memory_space<vmem>>, %arg9: memref<16x1xf32, #tpu.memory_space<vmem>>, %arg10: memref<1x128xf32, #tpu.memory_space<vmem>>) attributes {dimension_semantics = [#tpu.dimension_semantics<parallel>], iteration_bounds = array<i64: 1>, scalar_prefetch = 0 : i64, scratch_operands = 0 : i64, tpu.core_type = #tpu.core_type<tc>, window_params = [{transform_indices = @transform_0, window_bounds = array<i64: 16, 128>}, {pipeline_mode = #tpu.pipeline_mode<synchronous>, transform_indices = @transform_1, window_bounds = array<i64: 32, 16>}, {pipeline_mode = #tpu.pipeline_mode<synchronous>, transform_indices = @transform_2, window_bounds = array<i64: 32, 1>}, {pipeline_mode = #tpu.pipeline_mode<synchronous>, transform_indices = @transform_3, window_bounds = array<i64: 32, 32>}, {pipeline_mode = #tpu.pipeline_mode<synchronous>, transform_indices = @transform_4, window_bounds = array<i64: 32, 1>}, {pipeline_mode = #tpu.pipeline_mode<synchronous>, transform_indices = @transform_5, window_bounds = array<i64: 32, 32>}, {pipeline_mode = #tpu.pipeline_mode<synchronous>, transform_indices = @transform_6, window_bounds = array<i64: 32, 1>}, {pipeline_mode = #tpu.pipeline_mode<synchronous>, transform_indices = @transform_7, window_bounds = array<i64: 16, 32>}, {pipeline_mode = #tpu.pipeline_mode<synchronous>, transform_indices = @transform_8, window_bounds = array<i64: 16, 1>}, {transform_indices = @transform_9, window_bounds = array<i64: 1, 128>}]} {
    %c0 = arith.constant 0 : index
    %c0_0 = arith.constant 0 : index
    %0 = vector.load %arg1[%c0, %c0_0] : memref<16x128xbf16, #tpu.memory_space<vmem>>, vector<16x128xbf16>
    %c0_1 = arith.constant 0 : index
    %c0_2 = arith.constant 0 : index
    %1 = vector.load %arg2[%c0_1, %c0_2] : memref<32x16xbf16, #tpu.memory_space<vmem>>, vector<32x16xbf16>
    %c0_3 = arith.constant 0 : index
    %c0_4 = arith.constant 0 : index
    %2 = vector.load %arg3[%c0_3, %c0_4] : memref<32x1xf32, #tpu.memory_space<vmem>>, vector<32x1xf32>
    %cst = arith.constant dense<0.000000e+00> : vector<32x128xf32>
    %3 = tpu.matmul %1, %0, %cst {dimension_numbers = #tpu.dot_dimension_numbers<[1], [0], [0], [1], [0, 0, 1, 1], [], []>} : vector<32x16xbf16>, vector<16x128xbf16>, vector<32x128xf32> -> vector<32x128xf32>
    %4 = vector.broadcast %2 : vector<32x1xf32> to vector<32x128xf32>
    %5 = arith.addf %3, %4 : vector<32x128xf32>
    %cst_5 = arith.constant 0.000000e+00 : f32
    %6 = vector.broadcast %cst_5 : f32 to vector<32x128xf32>
    %7 = arith.maximumf %5, %6 : vector<32x128xf32>
    %c0_6 = arith.constant 0 : index
    %c0_7 = arith.constant 0 : index
    %8 = vector.load %arg4[%c0_6, %c0_7] : memref<32x32xbf16, #tpu.memory_space<vmem>>, vector<32x32xbf16>
    %c0_8 = arith.constant 0 : index
    %c0_9 = arith.constant 0 : index
    %9 = vector.load %arg5[%c0_8, %c0_9] : memref<32x1xf32, #tpu.memory_space<vmem>>, vector<32x1xf32>
    %10 = arith.truncf %7 : vector<32x128xf32> to vector<32x128xbf16>
    %cst_10 = arith.constant dense<0.000000e+00> : vector<32x128xf32>
    %11 = tpu.matmul %8, %10, %cst_10 {dimension_numbers = #tpu.dot_dimension_numbers<[1], [0], [0], [1], [0, 0, 1, 1], [], []>} : vector<32x32xbf16>, vector<32x128xbf16>, vector<32x128xf32> -> vector<32x128xf32>
    %12 = vector.broadcast %9 : vector<32x1xf32> to vector<32x128xf32>
    %13 = arith.addf %11, %12 : vector<32x128xf32>
    %cst_11 = arith.constant 0.000000e+00 : f32
    %14 = vector.broadcast %cst_11 : f32 to vector<32x128xf32>
    %15 = arith.maximumf %13, %14 : vector<32x128xf32>
    %c0_12 = arith.constant 0 : index
    %c0_13 = arith.constant 0 : index
    %16 = vector.load %arg6[%c0_12, %c0_13] : memref<32x32xbf16, #tpu.memory_space<vmem>>, vector<32x32xbf16>
    %c0_14 = arith.constant 0 : index
    %c0_15 = arith.constant 0 : index
    %17 = vector.load %arg7[%c0_14, %c0_15] : memref<32x1xf32, #tpu.memory_space<vmem>>, vector<32x1xf32>
    %18 = arith.truncf %15 : vector<32x128xf32> to vector<32x128xbf16>
    %cst_16 = arith.constant dense<0.000000e+00> : vector<32x128xf32>
    %19 = tpu.matmul %16, %18, %cst_16 {dimension_numbers = #tpu.dot_dimension_numbers<[1], [0], [0], [1], [0, 0, 1, 1], [], []>} : vector<32x32xbf16>, vector<32x128xbf16>, vector<32x128xf32> -> vector<32x128xf32>
    %20 = vector.broadcast %17 : vector<32x1xf32> to vector<32x128xf32>
    %21 = arith.addf %19, %20 : vector<32x128xf32>
    %cst_17 = arith.constant 0.000000e+00 : f32
    %22 = vector.broadcast %cst_17 : f32 to vector<32x128xf32>
    %23 = arith.maximumf %21, %22 : vector<32x128xf32>
    %c0_18 = arith.constant 0 : index
    %c0_19 = arith.constant 0 : index
    %24 = vector.load %arg8[%c0_18, %c0_19] : memref<16x32xbf16, #tpu.memory_space<vmem>>, vector<16x32xbf16>
    %c0_20 = arith.constant 0 : index
    %c0_21 = arith.constant 0 : index
    %25 = vector.load %arg9[%c0_20, %c0_21] : memref<16x1xf32, #tpu.memory_space<vmem>>, vector<16x1xf32>
    %26 = arith.truncf %23 : vector<32x128xf32> to vector<32x128xbf16>
    %cst_22 = arith.constant dense<0.000000e+00> : vector<16x128xf32>
    %27 = tpu.matmul %24, %26, %cst_22 {dimension_numbers = #tpu.dot_dimension_numbers<[1], [0], [0], [1], [0, 0, 1, 1], [], []>} : vector<16x32xbf16>, vector<32x128xbf16>, vector<16x128xf32> -> vector<16x128xf32>
    %28 = vector.broadcast %25 : vector<16x1xf32> to vector<16x128xf32>
    %29 = arith.addf %27, %28 : vector<16x128xf32>
    %30 = vector.extract_strided_slice %29 {offsets = [0, 0], sizes = [1, 128], strides = [1, 1]} : vector<16x128xf32> to vector<1x128xf32>
    %c0_23 = arith.constant 0 : index
    %c0_24 = arith.constant 0 : index
    %31 = vector.load %arg10[%c0_23, %c0_24] : memref<1x128xf32, #tpu.memory_space<vmem>>, vector<1x128xf32>
    tpu.vector_store %arg10[%c0_23, %c0_24], %30 {strides = array<i32>} : memref<1x128xf32, #tpu.memory_space<vmem>>, vector<1x128xf32>,
    return
  }
  func.func @transform_0(%arg0: i32) -> (i32, i32) {
    %c0_i32 = arith.constant 0 : i32
    %c0_i32_0 = arith.constant 0 : i32
    return %c0_i32, %arg0 : i32, i32
  }
  func.func @transform_1(%arg0: i32) -> (i32, i32) {
    %c0_i32 = arith.constant 0 : i32
    %c0_i32_0 = arith.constant 0 : i32
    %c0_i32_1 = arith.constant 0 : i32
    return %c0_i32, %c0_i32_0 : i32, i32
  }
  func.func @transform_2(%arg0: i32) -> (i32, i32) {
    %c0_i32 = arith.constant 0 : i32
    %c0_i32_0 = arith.constant 0 : i32
    %c0_i32_1 = arith.constant 0 : i32
    return %c0_i32, %c0_i32_0 : i32, i32
  }
  func.func @transform_3(%arg0: i32) -> (i32, i32) {
    %c0_i32 = arith.constant 0 : i32
    %c0_i32_0 = arith.constant 0 : i32
    %c0_i32_1 = arith.constant 0 : i32
    return %c0_i32, %c0_i32_0 : i32, i32
  }
  func.func @transform_4(%arg0: i32) -> (i32, i32) {
    %c0_i32 = arith.constant 0 : i32
    %c0_i32_0 = arith.constant 0 : i32
    %c0_i32_1 = arith.constant 0 : i32
    return %c0_i32, %c0_i32_0 : i32, i32
  }
  func.func @transform_5(%arg0: i32) -> (i32, i32) {
    %c0_i32 = arith.constant 0 : i32
    %c0_i32_0 = arith.constant 0 : i32
    %c0_i32_1 = arith.constant 0 : i32
    return %c0_i32, %c0_i32_0 : i32, i32
  }
  func.func @transform_6(%arg0: i32) -> (i32, i32) {
    %c0_i32 = arith.constant 0 : i32
    %c0_i32_0 = arith.constant 0 : i32
    %c0_i32_1 = arith.constant 0 : i32
    return %c0_i32, %c0_i32_0 : i32, i32
  }
  func.func @transform_7(%arg0: i32) -> (i32, i32) {
    %c0_i32 = arith.constant 0 : i32
    %c0_i32_0 = arith.constant 0 : i32
    %c0_i32_1 = arith.constant 0 : i32
    return %c0_i32, %c0_i32_0 : i32, i32
  }
  func.func @transform_8(%arg0: i32) -> (i32, i32) {
    %c0_i32 = arith.constant 0 : i32
    %c0_i32_0 = arith.constant 0 : i32
    %c0_i32_1 = arith.constant 0 : i32
    return %c0_i32, %c0_i32_0 : i32, i32
  }
  func.func @transform_9(%arg0: i32) -> (i32, i32) {
    %c0_i32 = arith.constant 0 : i32
    %c0_i32_0 = arith.constant 0 : i32
    return %c0_i32, %arg0 : i32, i32
  }
}

</mosaic_0001>

<llo_original>
// kernel: fcnn_forward.1
$region0: #{fcnn_forward.1}
  #allocation0 [shape = 'u32[]', space=smem, size = 0x4, offset = 0x4, fixed_abs, tag = 'smem constant byte address 0x4 - core index']
  #allocation1 [shape = 'u32[144,128]{1,0:T(1,128)}', space=vmem, size = 0x12000, scoped, tag = 'internal scratch']
  %s0 = inlined_call_operand.vmem [shape: bf16[16,128], index: 0, kind: input, shape index: {}]
  %s1 = inlined_call_operand.vmem [shape: bf16[32,16], index: 1, kind: input, shape index: {}]
  %s2 = inlined_call_operand.vmem [shape: f32[32,1], index: 2, kind: input, shape index: {}]
  %s3 = inlined_call_operand.vmem [shape: bf16[32,32], index: 3, kind: input, shape index: {}]
  %s4 = inlined_call_operand.vmem [shape: f32[32,1], index: 4, kind: input, shape index: {}]
  %s5 = inlined_call_operand.vmem [shape: bf16[32,32], index: 5, kind: input, shape index: {}]
  %s6 = inlined_call_operand.vmem [shape: f32[32,1], index: 6, kind: input, shape index: {}]
  %s7 = inlined_call_operand.vmem [shape: bf16[16,32], index: 7, kind: input, shape index: {}]
  %s8 = inlined_call_operand.vmem [shape: f32[16,1], index: 8, kind: input, shape index: {}]
  %s9 = inlined_call_operand.vmem [shape: f32[1,128], index: 9, kind: output, shape index: {}]
  %s10 = sld [smem:[#allocation0]]
  $region46: #{fcnn_forward.1} parent=0
    _
  %s12 = ssub.s32 1, %s10
  %s13 = scalar_select 0, %s12, %s10
  // Predicated region
  $region2: #{fcnn_forward.1} parent=0 // pred_check
    _
  $region3: #{fcnn_forward.1} parent=0 // pred_check_branch
    %15 = sbr.rel (0) target = $region5
  $region4: #{fcnn_forward.1} parent=0 // pred_region
    _
  $region5: #{fcnn_forward.1} parent=0 // pred_fallthru
    _
  // Predicated region
  $region6: #{fcnn_forward.1} parent=0 // pred_check
    _
  $region7: #{fcnn_forward.1} parent=0 // pred_check_branch
    %17 = sbr.rel (0) target = $region9
  $region8: #{fcnn_forward.1} parent=0 // pred_region
    _
  $region9: #{fcnn_forward.1} parent=0 // pred_fallthru
    _
  // Predicated region
  $region10: #{fcnn_forward.1} parent=0 // pred_check
    _
  $region11: #{fcnn_forward.1} parent=0 // pred_check_branch
    %19 = sbr.rel (0) target = $region13
  $region12: #{fcnn_forward.1} parent=0 // pred_region
    _
  $region13: #{fcnn_forward.1} parent=0 // pred_fallthru
    _
  // Predicated region
  $region14: #{fcnn_forward.1} parent=0 // pred_check
    _
  $region15: #{fcnn_forward.1} parent=0 // pred_check_branch
    %21 = sbr.rel (0) target = $region17
  $region16: #{fcnn_forward.1} parent=0 // pred_region
    _
  $region17: #{fcnn_forward.1} parent=0 // pred_fallthru
    _
  // Predicated region
  $region18: #{fcnn_forward.1} parent=0 // pred_check
    _
  $region19: #{fcnn_forward.1} parent=0 // pred_check_branch
    %23 = sbr.rel (0) target = $region21
  $region20: #{fcnn_forward.1} parent=0 // pred_region
    _
  $region21: #{fcnn_forward.1} parent=0 // pred_fallthru
    _
  // Predicated region
  $region22: #{fcnn_forward.1} parent=0 // pred_check
    _
  $region23: #{fcnn_forward.1} parent=0 // pred_check_branch
    %25 = sbr.rel (0) target = $region25
  $region24: #{fcnn_forward.1} parent=0 // pred_region
    _
  $region25: #{fcnn_forward.1} parent=0 // pred_fallthru
    _
  // Predicated region
  $region26: #{fcnn_forward.1} parent=0 // pred_check
    _
  $region27: #{fcnn_forward.1} parent=0 // pred_check_branch
    %27 = sbr.rel (0) target = $region29
  $region28: #{fcnn_forward.1} parent=0 // pred_region
    _
  $region29: #{fcnn_forward.1} parent=0 // pred_fallthru
    _
  // Predicated region
  $region30: #{fcnn_forward.1} parent=0 // pred_check
    _
  $region31: #{fcnn_forward.1} parent=0 // pred_check_branch
    %29 = sbr.rel (0) target = $region33
  $region32: #{fcnn_forward.1} parent=0 // pred_region
    _
  $region33: #{fcnn_forward.1} parent=0 // pred_fallthru
    _
  // Predicated region
  $region34: #{fcnn_forward.1} parent=0 // pred_check
    _
  $region35: #{fcnn_forward.1} parent=0 // pred_check_branch
    %31 = sbr.rel (0) target = $region37
  $region36: #{fcnn_forward.1} parent=0 // pred_region
    _
  $region37: #{fcnn_forward.1} parent=0 // pred_fallthru
    _
  %v33 = vld [vmem:[%s0] sm:$0xf]
  %v34 = vld [vmem:[%s0 + $0x4] sm:$0xf]
  %v35 = vld [vmem:[%s1] sm:$0xf]
  %v36 = vld [vmem:[%s1 + $0x4] sm:$0xf]
  %v37 = vld [vmem:[%s1 + $0x8] sm:$0xf]
  %v38 = vld [vmem:[%s1 + $0xc] sm:$0xf]
  %v39 = vld [vmem:[%s2] sm:$0xff]
  %v40 = vld [vmem:[%s2 + $0x8] sm:$0xff]
  %v41 = vld [vmem:[%s2 + $0x10] sm:$0xff]
  %v42 = vld [vmem:[%s2 + $0x18] sm:$0xff]
  %44 = vset.pattern.permute.xlu0 0
  %45 = vperm.xlu0 %44, %v39
  %v46 = vpop.permute.xlu0 %45
  %49 = vset.pattern.permute.xlu0 0
  %50 = vperm.xlu0 %49, %v40
  %v51 = vpop.permute.xlu0 %50
  %54 = vset.pattern.permute.xlu0 0
  %55 = vperm.xlu0 %54, %v41
  %v56 = vpop.permute.xlu0 %55
  %59 = vset.pattern.permute.xlu0 0
  %60 = vperm.xlu0 %59, %v42
  %v61 = vpop.permute.xlu0 %60
  %v67 = vunpack.c.l.b16 %v35
  %v68 = vunpack.c.l.b16 %v36
  %v69 = vunpack.c.l.b16 %v37
  %v70 = vunpack.c.l.b16 %v38
  %v71 = vpack.c.b16 %v68, %v67
  %v72 = vpack.c.b16 %v70, %v69
  %v75 = vunpack.c.l.b16 %v33
  %v76 = vunpack.c.l.b16 %v34
  %v77 = vpack.c.b16 %v76, %v75
  %vm79 = vcmask 130048
  %v81 = vsel %vm79, %v71, 0
  %v84 = vsel %vm79, %v72, 0
  %86 = vmatprep.subr.bf16.mxu0 0
  %87 = vmatpush1.bf16.msra.mxu0 0
  %88 = vmatprep.subr.bf16.mxu0 0
  %89 = vmatpush1.bf16.msra.mxu0 0
  %90 = vmatprep.subr.bf16.mxu0 0
  %91 = vmatpush1.bf16.msra.mxu0 0
  %92 = vmatprep.subr.bf16.mxu0 0
  %93 = vmatpush1.bf16.msra.mxu0 0
  %94 = vmatprep.subr.bf16.mxu0 0
  %95 = vmatpush1.bf16.msra.mxu0 0
  %96 = vmatprep.subr.bf16.mxu0 0
  %97 = vmatpush1.bf16.msra.mxu0 0
  %98 = vmatprep.subr.bf16.mxu0 0
  %99 = vmatpush1.bf16.msra.mxu0 0
  %100 = vmatprep.subr.bf16.mxu0 0
  %101 = vmatpush1.bf16.msra.mxu0 %v77
  %102 = vmatprep.subr.bf16.mxu0 0
  %103 = vmatpush2.bf16.msra.mxu0 0
  %104 = vmatprep.subr.bf16.mxu0 0
  %105 = vmatpush2.bf16.msra.mxu0 0
  %106 = vmatprep.subr.bf16.mxu0 0
  %107 = vmatpush2.bf16.msra.mxu0 0
  %108 = vmatprep.subr.bf16.mxu0 0
  %109 = vmatpush2.bf16.msra.mxu0 0
  %110 = vmatprep.subr.bf16.mxu0 0
  %111 = vmatpush2.bf16.msra.mxu0 0
  %112 = vmatprep.subr.bf16.mxu0 0
  %113 = vmatpush2.bf16.msra.mxu0 0
  %114 = vmatprep.subr.bf16.mxu0 0
  %115 = vmatpush2.bf16.msra.mxu0 0
  %116 = vmatprep.subr.bf16.mxu0 0
  %117 = vmatpush2.bf16.msra.mxu0 0
  %118 = vmatprep.mubr.bf16.mxu0 0
  %119 = vmatmul.mubr.bf16.gmra.mxu0 %v81
  %v120 = vpop.f32.mrf.mxu0
  %v121 = vadd.f32 %v46, %v120
  %v122 = vpop.f32.mrf.mxu0
  %v123 = vpop.f32.mrf.mxu0
  %v124 = vadd.f32 %v51, %v123
  %v125 = vpop.f32.mrf.mxu0
  %126 = vmatprep.mubr.bf16.mxu0 0
  %127 = vmatmul.mubr.bf16.gmra.mxu0 %v84
  %v128 = vpop.f32.mrf.mxu0
  %v129 = vadd.f32 %v56, %v128
  %v130 = vpop.f32.mrf.mxu0
  %v131 = vpop.f32.mrf.mxu0
  %v132 = vadd.f32 %v61, %v131
  %v133 = vpop.f32.mrf.mxu0
  %134 = vdwg.mxu0
  %v135 = vmax.f32 %v121, 0.0
  %v136 = vmax.f32 %v124, 0.0
  %v137 = vmax.f32 %v129, 0.0
  %v138 = vmax.f32 %v132, 0.0
  %v139 = vld [vmem:[%s3] sm:$0xf]
  %v140 = vld [vmem:[%s3 + $0x4] sm:$0xf]
  %v141 = vld [vmem:[%s3 + $0x8] sm:$0xf]
  %v142 = vld [vmem:[%s3 + $0xc] sm:$0xf]
  %v143 = vld [vmem:[%s4] sm:$0xff]
  %v144 = vld [vmem:[%s4 + $0x8] sm:$0xff]
  %v145 = vld [vmem:[%s4 + $0x10] sm:$0xff]
  %v146 = vld [vmem:[%s4 + $0x18] sm:$0xff]
  %v147 = vpack.c.bf16 %v136, %v135
  %v148 = vpack.c.bf16 %v138, %v137
  %150 = vset.pattern.permute.xlu0 0
  %151 = vperm.xlu0 %150, %v143
  %v152 = vpop.permute.xlu0 %151
  %155 = vset.pattern.permute.xlu0 0
  %156 = vperm.xlu0 %155, %v144
  %v157 = vpop.permute.xlu0 %156
  %160 = vset.pattern.permute.xlu0 0
  %161 = vperm.xlu0 %160, %v145
  %v162 = vpop.permute.xlu0 %161
  %165 = vset.pattern.permute.xlu0 0
  %166 = vperm.xlu0 %165, %v146
  %v167 = vpop.permute.xlu0 %166
  %v173 = vunpack.c.l.b16 %v139
  %v174 = vunpack.c.l.b16 %v140
  %v175 = vunpack.c.l.b16 %v141
  %v176 = vunpack.c.l.b16 %v142
  %v177 = vpack.c.b16 %v174, %v173
  %v178 = vpack.c.b16 %v176, %v175
  %vm179 = vcmask 261120
  %v181 = vsel %vm179, %v177, 0
  %v184 = vsel %vm179, %v178, 0
  %186 = vmatprep.subr.bf16.mxu0 0
  %187 = vmatpush1.bf16.msra.mxu0 0
  %188 = vmatprep.subr.bf16.mxu0 0
  %189 = vmatpush1.bf16.msra.mxu0 0
  %190 = vmatprep.subr.bf16.mxu0 0
  %191 = vmatpush1.bf16.msra.mxu0 0
  %192 = vmatprep.subr.bf16.mxu0 0
  %193 = vmatpush1.bf16.msra.mxu0 0
  %194 = vmatprep.subr.bf16.mxu0 0
  %195 = vmatpush1.bf16.msra.mxu0 0
  %196 = vmatprep.subr.bf16.mxu0 0
  %197 = vmatpush1.bf16.msra.mxu0 0
  %198 = vmatprep.subr.bf16.mxu0 0
  %199 = vmatpush1.bf16.msra.mxu0 %v148
  %200 = vmatprep.subr.bf16.mxu0 0
  %201 = vmatpush1.bf16.msra.mxu0 %v147
  %202 = vmatprep.subr.bf16.mxu0 0
  %203 = vmatpush2.bf16.msra.mxu0 0
  %204 = vmatprep.subr.bf16.mxu0 0
  %205 = vmatpush2.bf16.msra.mxu0 0
  %206 = vmatprep.subr.bf16.mxu0 0
  %207 = vmatpush2.bf16.msra.mxu0 0
  %208 = vmatprep.subr.bf16.mxu0 0
  %209 = vmatpush2.bf16.msra.mxu0 0
  %210 = vmatprep.subr.bf16.mxu0 0
  %211 = vmatpush2.bf16.msra.mxu0 0
  %212 = vmatprep.subr.bf16.mxu0 0
  %213 = vmatpush2.bf16.msra.mxu0 0
  %214 = vmatprep.subr.bf16.mxu0 0
  %215 = vmatpush2.bf16.msra.mxu0 0
  %216 = vmatprep.subr.bf16.mxu0 0
  %217 = vmatpush2.bf16.msra.mxu0 0
  %218 = vmatprep.mubr.bf16.mxu0 0
  %219 = vmatmul.mubr.bf16.gmra.mxu0 %v181
  %v220 = vpop.f32.mrf.mxu0
  %v221 = vadd.f32 %v152, %v220
  %v222 = vpop.f32.mrf.mxu0
  %v223 = vpop.f32.mrf.mxu0
  %v224 = vadd.f32 %v157, %v223
  %v225 = vpop.f32.mrf.mxu0
  %226 = vmatprep.mubr.bf16.mxu0 0
  %227 = vmatmul.mubr.bf16.gmra.mxu0 %v184
  %v228 = vpop.f32.mrf.mxu0
  %v229 = vadd.f32 %v162, %v228
  %v230 = vpop.f32.mrf.mxu0
  %v231 = vpop.f32.mrf.mxu0
  %v232 = vadd.f32 %v167, %v231
  %v233 = vpop.f32.mrf.mxu0
  %234 = vdwg.mxu0
  %v235 = vmax.f32 %v221, 0.0
  %v236 = vmax.f32 %v224, 0.0
  %v237 = vmax.f32 %v229, 0.0
  %v238 = vmax.f32 %v232, 0.0
  %v239 = vld [vmem:[%s5] sm:$0xf]
  %v240 = vld [vmem:[%s5 + $0x4] sm:$0xf]
  %v241 = vld [vmem:[%s5 + $0x8] sm:$0xf]
  %v242 = vld [vmem:[%s5 + $0xc] sm:$0xf]
  %v243 = vld [vmem:[%s6] sm:$0xff]
  %v244 = vld [vmem:[%s6 + $0x8] sm:$0xff]
  %v245 = vld [vmem:[%s6 + $0x10] sm:$0xff]
  %v246 = vld [vmem:[%s6 + $0x18] sm:$0xff]
  %v247 = vpack.c.bf16 %v236, %v235
  %v248 = vpack.c.bf16 %v238, %v237
  %250 = vset.pattern.permute.xlu0 0
  %251 = vperm.xlu0 %250, %v243
  %v252 = vpop.permute.xlu0 %251
  %255 = vset.pattern.permute.xlu0 0
  %256 = vperm.xlu0 %255, %v244
  %v257 = vpop.permute.xlu0 %256
  %260 = vset.pattern.permute.xlu0 0
  %261 = vperm.xlu0 %260, %v245
  %v262 = vpop.permute.xlu0 %261
  %265 = vset.pattern.permute.xlu0 0
  %266 = vperm.xlu0 %265, %v246
  %v267 = vpop.permute.xlu0 %266
  %v273 = vunpack.c.l.b16 %v239
  %v274 = vunpack.c.l.b16 %v240
  %v275 = vunpack.c.l.b16 %v241
  %v276 = vunpack.c.l.b16 %v242
  %v277 = vpack.c.b16 %v274, %v273
  %v278 = vpack.c.b16 %v276, %v275
  %v280 = vsel %vm179, %v277, 0
  %v283 = vsel %vm179, %v278, 0
  %285 = vmatprep.subr.bf16.mxu0 0
  %286 = vmatpush1.bf16.msra.mxu0 0
  %287 = vmatprep.subr.bf16.mxu0 0
  %288 = vmatpush1.bf16.msra.mxu0 0
  %289 = vmatprep.subr.bf16.mxu0 0
  %290 = vmatpush1.bf16.msra.mxu0 0
  %291 = vmatprep.subr.bf16.mxu0 0
  %292 = vmatpush1.bf16.msra.mxu0 0
  %293 = vmatprep.subr.bf16.mxu0 0
  %294 = vmatpush1.bf16.msra.mxu0 0
  %295 = vmatprep.subr.bf16.mxu0 0
  %296 = vmatpush1.bf16.msra.mxu0 0
  %297 = vmatprep.subr.bf16.mxu0 0
  %298 = vmatpush1.bf16.msra.mxu0 %v248
  %299 = vmatprep.subr.bf16.mxu0 0
  %300 = vmatpush1.bf16.msra.mxu0 %v247
  %301 = vmatprep.subr.bf16.mxu0 0
  %302 = vmatpush2.bf16.msra.mxu0 0
  %303 = vmatprep.subr.bf16.mxu0 0
  %304 = vmatpush2.bf16.msra.mxu0 0
  %305 = vmatprep.subr.bf16.mxu0 0
  %306 = vmatpush2.bf16.msra.mxu0 0
  %307 = vmatprep.subr.bf16.mxu0 0
  %308 = vmatpush2.bf16.msra.mxu0 0
  %309 = vmatprep.subr.bf16.mxu0 0
  %310 = vmatpush2.bf16.msra.mxu0 0
  %311 = vmatprep.subr.bf16.mxu0 0
  %312 = vmatpush2.bf16.msra.mxu0 0
  %313 = vmatprep.subr.bf16.mxu0 0
  %314 = vmatpush2.bf16.msra.mxu0 0
  %315 = vmatprep.subr.bf16.mxu0 0
  %316 = vmatpush2.bf16.msra.mxu0 0
  %317 = vmatprep.mubr.bf16.mxu0 0
  %318 = vmatmul.mubr.bf16.gmra.mxu0 %v280
  %v319 = vpop.f32.mrf.mxu0
  %v320 = vadd.f32 %v252, %v319
  %v321 = vpop.f32.mrf.mxu0
  %v322 = vpop.f32.mrf.mxu0
  %v323 = vadd.f32 %v257, %v322
  %v324 = vpop.f32.mrf.mxu0
  %325 = vmatprep.mubr.bf16.mxu0 0
  %326 = vmatmul.mubr.bf16.gmra.mxu0 %v283
  %v327 = vpop.f32.mrf.mxu0
  %v328 = vadd.f32 %v262, %v327
  %v329 = vpop.f32.mrf.mxu0
  %v330 = vpop.f32.mrf.mxu0
  %v331 = vadd.f32 %v267, %v330
  %v332 = vpop.f32.mrf.mxu0
  %333 = vdwg.mxu0
  %v334 = vmax.f32 %v320, 0.0
  %v335 = vmax.f32 %v323, 0.0
  %v336 = vmax.f32 %v328, 0.0
  %v337 = vmax.f32 %v331, 0.0
  %v338 = vld [vmem:[%s7] sm:$0xf]
  %v339 = vld [vmem:[%s7 + $0x4] sm:$0xf]
  %v340 = vld [vmem:[%s8] sm:$0xff]
  %v341 = vld [vmem:[%s8 + $0x8] sm:$0xff]
  %v342 = vpack.c.bf16 %v335, %v334
  %v343 = vpack.c.bf16 %v337, %v336
  %345 = vset.pattern.permute.xlu0 0
  %346 = vperm.xlu0 %345, %v340
  %v347 = vpop.permute.xlu0 %346
  %350 = vset.pattern.permute.xlu0 0
  %351 = vperm.xlu0 %350, %v341
  %v352 = vpop.permute.xlu0 %351
  %v355 = vunpack.c.l.b16 %v338
  %v356 = vunpack.c.l.b16 %v339
  %v357 = vpack.c.b16 %v356, %v355
  %v359 = vsel %vm179, %v357, 0
  %361 = vmatprep.subr.bf16.mxu0 0
  %362 = vmatpush1.bf16.msra.mxu0 0
  %363 = vmatprep.subr.bf16.mxu0 0
  %364 = vmatpush1.bf16.msra.mxu0 0
  %365 = vmatprep.subr.bf16.mxu0 0
  %366 = vmatpush1.bf16.msra.mxu0 0
  %367 = vmatprep.subr.bf16.mxu0 0
  %368 = vmatpush1.bf16.msra.mxu0 0
  %369 = vmatprep.subr.bf16.mxu0 0
  %370 = vmatpush1.bf16.msra.mxu0 0
  %371 = vmatprep.subr.bf16.mxu0 0
  %372 = vmatpush1.bf16.msra.mxu0 0
  %373 = vmatprep.subr.bf16.mxu0 0
  %374 = vmatpush1.bf16.msra.mxu0 %v343
  %375 = vmatprep.subr.bf16.mxu0 0
  %376 = vmatpush1.bf16.msra.mxu0 %v342
  %377 = vmatprep.subr.bf16.mxu0 0
  %378 = vmatpush2.bf16.msra.mxu0 0
  %379 = vmatprep.subr.bf16.mxu0 0
  %380 = vmatpush2.bf16.msra.mxu0 0
  %381 = vmatprep.subr.bf16.mxu0 0
  %382 = vmatpush2.bf16.msra.mxu0 0
  %383 = vmatprep.subr.bf16.mxu0 0
  %384 = vmatpush2.bf16.msra.mxu0 0
  %385 = vmatprep.subr.bf16.mxu0 0
  %386 = vmatpush2.bf16.msra.mxu0 0
  %387 = vmatprep.subr.bf16.mxu0 0
  %388 = vmatpush2.bf16.msra.mxu0 0
  %389 = vmatprep.subr.bf16.mxu0 0
  %390 = vmatpush2.bf16.msra.mxu0 0
  %391 = vmatprep.subr.bf16.mxu0 0
  %392 = vmatpush2.bf16.msra.mxu0 0
  %393 = vmatprep.mubr.bf16.mxu0 0
  %394 = vmatmul.mubr.bf16.gmra.mxu0 %v359
  %v395 = vpop.f32.mrf.mxu0
  %v396 = vadd.f32 %v347, %v395
  %v397 = vpop.f32.mrf.mxu0
  %v398 = vpop.f32.mrf.mxu0
  %v399 = vpop.f32.mrf.mxu0
  %400 = vdwg.mxu0
  %401 = vst [vmem:[%s9] sm:$0x1] %v396
  // Predicated region
  $region38: #{fcnn_forward.1} parent=0 // pred_check
    _
  $region39: #{fcnn_forward.1} parent=0 // pred_check_branch
    %403 = sbr.rel (0) target = $region41
  $region40: #{fcnn_forward.1} parent=0 // pred_region
    _
  $region41: #{fcnn_forward.1} parent=0 // pred_fallthru
    _
  // Predicated region
  $region42: #{fcnn_forward.1} parent=0 // pred_check
    _
  $region43: #{fcnn_forward.1} parent=0 // pred_check_branch
    %405 = sbr.rel (0) target = $region45
  $region44: #{fcnn_forward.1} parent=0 // pred_region
    _
  $region45: #{fcnn_forward.1} parent=0 // pred_fallthru
    _

</llo_original>
